<compile_context>
chip_gen: v5e
topology: v5e:2x2
jax: 0.10.0
libtpu: 0.0.40
codegen_flags: <defaults>
</compile_context>

<pallas_src>
import functools

import jax
import jax.numpy as jnp
from jax.experimental import pallas as pl
from jax.experimental.pallas import tpu as pltpu


def _round_up(x, m):
    return ((x + m - 1) // m) * m


def _pick_tile(n_pad, target):
    """Largest multiple of 128 that divides n_pad and is <= target (n_pad is a 128-multiple)."""
    t = min(_round_up(max(target, 1), 128), n_pad)
    t -= t % 128
    while n_pad % t:
        t -= 128
    return t


def _gc_aggregate_first_kernel(adj_ref, feat_ref, w_ref, norm_ref, o_ref, acc_ref,
                               *, compute_dtype):
    """out = (A_norm @ [X | 1]) @ [W^T ; b]  — aggregation first (out_dim >= in_dim)."""
    k = pl.program_id(2)

    @pl.when(k == 0)
    def _init():
        acc_ref[...] = jnp.zeros_like(acc_ref)

    # acc += A_hat[i-tile, k-tile] @ [norm*X | norm][k-tile]   (f32 accumulation)
    acc_ref[...] += jnp.dot(adj_ref[0], feat_ref[0], preferred_element_type=jnp.float32)

    @pl.when(k == pl.num_programs(2) - 1)
    def _finalize():
        # agg = A_norm @ [X | 1]; the ride-along column (A_norm row sums) times the bias
        # row of Waug reproduces the bias term: out = (A_norm X) W^T + (A_norm 1) b.
        agg = (norm_ref[0] * acc_ref[...]).astype(compute_dtype)
        o_ref[0] = jnp.dot(agg, w_ref[...],
                           preferred_element_type=jnp.float32).astype(o_ref.dtype)


def _gc_aggregate_second_kernel(adj_ref, feat_ref, w_ref, norm_ref, o_ref, acc_ref,
                                *, compute_dtype):
    """out = norm_i * (A_hat @ (norm_k * (X W^T + b)))  — projection first (out_dim < in_dim)."""
    k = pl.program_id(2)

    @pl.when(k == 0)
    def _init():
        acc_ref[...] = jnp.zeros_like(acc_ref)

    # nh = norm_k * (X W^T + b): the norm_k scaling and the bias are already folded into
    # F = [norm*X | norm] and Waug = [W^T ; b], so one matmul does it all.
    # TODO(synk): when n_pad // tm > 1 this re-projects each k-tile once per row tile;
    #             stage nh per k-tile in a dedicated pass if in_dim is large.
    nh = jnp.dot(feat_ref[0], w_ref[...],
                 preferred_element_type=jnp.float32).astype(compute_dtype)
    acc_ref[...] += jnp.dot(adj_ref[0], nh, preferred_element_type=jnp.float32)

    @pl.when(k == pl.num_programs(2) - 1)
    def _finalize():
        o_ref[0] = (norm_ref[0] * acc_ref[...]).astype(o_ref.dtype)


def gc_layer_batched(adj, x, weight, bias, *, compute_dtype=jnp.bfloat16,
                     aggregate_first=None, out_dtype=jnp.float32,
                     tm_target=256, tk_target=512):
    """Batched GCLayer forward.

    adj:    (B, N, N)          non-negative adjacency per graph
    x:      (B, N, in_dim)     node features
    weight: (out_dim, in_dim)  torch nn.Linear layout
    bias:   (out_dim,)
    returns (B, N, out_dim) in out_dtype
    """
    B, N, _ = adj.shape
    in_dim = x.shape[-1]
    out_dim = weight.shape[0]
    if aggregate_first is None:
        aggregate_first = out_dim >= in_dim

    f32 = jnp.float32
    adj = adj.astype(f32)
    x = x.astype(f32)

    # A_hat = adj + I without materializing eye(N); degree / norm from the f32 adjacency
    # (never from the bf16 copy).
    di = jnp.arange(N)
    adj_hat = adj.at[:, di, di].add(1.0)
    norm = jax.lax.rsqrt(jnp.sum(adj_hat, axis=-1, keepdims=True))     # (B, N, 1) f32

    # Padded sizes: N -> 128 (lane granule / MXU contraction), features -> 128 with one
    # spare column reserved for the ride-along norm column.
    # TODO(synk): pad to 256 on v6e/v7x when min(in,out) is large enough to be MXU-bound.
    n_pad = _round_up(N, 128)
    in_pad = _round_up(in_dim + 1, 128)
    out_pad = _round_up(out_dim, 128)
    tm = _pick_tile(n_pad, tm_target)
    tk = _pick_tile(n_pad, tk_target)
    num_i, num_k = n_pad // tm, n_pad // tk
    pad_n = n_pad - N

    # HBM operands in the MXU compute dtype; norm stays f32 (pad rows -> 0, sliced off later).
    adj_p = jnp.pad(adj_hat, ((0, 0), (0, pad_n), (0, pad_n))).astype(compute_dtype)
    feat = jnp.concatenate([norm * x, norm], axis=-1)                  # (B, N, in_dim + 1)
    feat_p = jnp.pad(feat, ((0, 0), (0, pad_n),
                            (0, in_pad - in_dim - 1))).astype(compute_dtype)
    w_aug = jnp.concatenate([weight.astype(f32).T,
                             bias.astype(f32).reshape(1, -1)], axis=0)  # (in_dim + 1, out_dim)
    w_p = jnp.pad(w_aug, ((0, in_pad - in_dim - 1),
                          (0, out_pad - out_dim))).astype(compute_dtype)
    norm_p = jnp.pad(norm, ((0, 0), (0, pad_n), (0, 0)))                # (B, n_pad, 1) f32

    acc_dim = in_pad if aggregate_first else out_pad
    kernel = functools.partial(
        _gc_aggregate_first_kernel if aggregate_first else _gc_aggregate_second_kernel,
        compute_dtype=compute_dtype)

    cb = jnp.dtype(compute_dtype).itemsize
    ob = jnp.dtype(out_dtype).itemsize

    # Cost estimate with real per-dtype sizes (adj read once, features once per row tile).
    agg_flops = 2 * B * n_pad * n_pad * acc_dim
    proj_flops = 2 * B * n_pad * in_pad * out_pad * (1 if aggregate_first else num_i)
    bytes_accessed = (adj_p.size * cb + num_i * feat_p.size * cb + w_p.size * cb
                      + norm_p.size * 4 + B * n_pad * out_pad * ob)

    # VMEM: double-buffered blocks + accumulator + in-kernel temporaries, 1.5x margin,
    # capped to a v7x-safe scoped limit.
    block_bytes = (2 * tm * tk * cb                     # adj tiles
                   + 2 * tk * in_pad * cb               # feature tiles
                   + 2 * in_pad * out_pad * cb          # Waug
                   + 2 * tm * 4 + 2 * tk * 4            # norm tiles
                   + 2 * tm * out_pad * ob              # output tiles
                   + tm * acc_dim * 4                   # f32 accumulator scratch
                   + 4 * max(tm, tk) * max(in_pad, out_pad) * 4)   # temporaries
    vmem_limit = int(min(max(block_bytes * 3 // 2, 16 * 1024 * 1024), 56 * 1024 * 1024))

    out = pl.pallas_call(
        kernel,
        out_shape=jax.ShapeDtypeStruct((B, n_pad, out_pad), out_dtype),
        grid=(B, num_i, num_k),
        in_specs=[
            pl.BlockSpec((1, tm, tk), lambda b, i, k: (b, i, k)),       # adjacency tile
            pl.BlockSpec((1, tk, in_pad), lambda b, i, k: (b, k, 0)),   # [norm*X | norm] tile
            pl.BlockSpec((in_pad, out_pad), lambda b, i, k: (0, 0)),    # [W^T ; b]
            pl.BlockSpec((1, tm, 1), lambda b, i, k: (b, i, 0)),        # norm (row tile)
        ],
        out_specs=pl.BlockSpec((1, tm, out_pad), lambda b, i, k: (b, i, 0)),
        scratch_shapes=[pltpu.VMEM((tm, acc_dim), jnp.float32)],
        compiler_params=pltpu.CompilerParams(
            dimension_semantics=("parallel", "parallel", "arbitrary"),
            vmem_limit_bytes=vmem_limit,
        ),
        cost_estimate=pl.CostEstimate(
            flops=int(agg_flops + proj_flops),
            transcendentals=0,
            bytes_accessed=int(bytes_accessed),
        ),
    )(adj_p, feat_p, w_p, norm_p)

    return out[:, :N, :out_dim]


def gc_layer(adj, x, weight, bias, **kwargs):
    """Single-graph wrapper matching the PyTorch module's forward signature."""
    return gc_layer_batched(adj[None], x[None], weight, bias, **kwargs)[0]


def gc_layer_ref(adj, x, weight, bias):
    """Pure-JAX reference mirroring the PyTorch forward exactly."""
    n = adj.shape[0]
    adj_hat = adj + jnp.eye(n, dtype=adj.dtype)
    h = x @ weight.T + bias
    norm = jnp.sum(adj_hat, axis=1) ** (-0.5)
    return (norm[None, :] * adj_hat * norm[:, None]) @ h


if __name__ == "__main__":
    B, N, IN_DIM, OUT_DIM = 4, 8, 16, 32

    key = jax.random.PRNGKey(0)
    k_adj, k_x, k_w, k_b = jax.random.split(key, 4)

    # Non-negative adjacency so degrees are positive (rsqrt well defined).
    adj = jax.random.uniform(k_adj, (B, N, N), dtype=jnp.float32)
    x = jax.random.normal(k_x, (B, N, IN_DIM), dtype=jnp.float32)
    weight = jax.random.normal(k_w, (OUT_DIM, IN_DIM), dtype=jnp.float32) * 0.1
    bias = jax.random.normal(k_b, (OUT_DIM,), dtype=jnp.float32) * 0.1

    ref = jax.vmap(lambda a, f: gc_layer_ref(a, f, weight, bias))(adj, x)

    # f32 storage/MXU operands, aggregation-first association (out_dim >= in_dim): tight check.
    out_f32 = jax.block_until_ready(
        gc_layer_batched(adj, x, weight, bias, compute_dtype=jnp.float32))
    assert out_f32.shape == (B, N, OUT_DIM)
    assert jnp.allclose(out_f32, ref, atol=1e-4, rtol=1e-4), "f32 kernel mismatch"

    # f32, other association (A_norm @ (X W^T + b)) — exercised for coverage.
    out_alt = jax.block_until_ready(
        gc_layer_batched(adj, x, weight, bias, compute_dtype=jnp.float32,
                         aggregate_first=False))
    assert jnp.allclose(out_alt, ref, atol=1e-4, rtol=1e-4), "alt-association mismatch"

    # bf16 storage + MXU operands with f32 accumulation — throughput path; looser tolerance.
    out_bf16 = jax.block_until_ready(
        gc_layer_batched(adj, x, weight, bias, compute_dtype=jnp.bfloat16))
    assert jnp.allclose(out_bf16, ref, atol=5e-2, rtol=5e-2), "bf16 kernel mismatch"

    # Single-graph wrapper (module-equivalent interface).
    out_single = jax.block_until_ready(
        gc_layer(adj[0], x[0], weight, bias, compute_dtype=jnp.float32))
    assert jnp.allclose(out_single, ref[0], atol=1e-4, rtol=1e-4), "single-graph mismatch"

    print("KERNEL_OK")
</pallas_src>

<mosaic_0001>
module attributes {stable_mosaic.version = 11 : i64} {
  func.func @_gc_aggregate_first_kernel(%arg0: i32, %arg1: i32, %arg2: i32, %arg3: memref<1x128x128xf32, #tpu.memory_space<vmem>>, %arg4: memref<1x128x128xf32, #tpu.memory_space<vmem>>, %arg5: memref<128x128xf32, #tpu.memory_space<vmem>>, %arg6: memref<1x128x1xf32, #tpu.memory_space<vmem>>, %arg7: memref<1x128x128xf32, #tpu.memory_space<vmem>>, %arg8: memref<128x128xf32, #tpu.memory_space<vmem>>) attributes {dimension_semantics = [#tpu.dimension_semantics<parallel>, #tpu.dimension_semantics<parallel>, #tpu.dimension_semantics<arbitrary>], iteration_bounds = array<i64: 4, 1, 1>, scalar_prefetch = 0 : i64, scratch_operands = 1 : i64, tpu.core_type = #tpu.core_type<tc>, window_params = [{transform_indices = @transform_0, window_bounds = array<i64: 1, 128, 128>}, {transform_indices = @transform_1, window_bounds = array<i64: 1, 128, 128>}, {pipeline_mode = #tpu.pipeline_mode<synchronous>, transform_indices = @transform_2, window_bounds = array<i64: 128, 128>}, {transform_indices = @transform_3, window_bounds = array<i64: 1, 128, 1>}, {transform_indices = @transform_4, window_bounds = array<i64: 1, 128, 128>}]} {
    %c0_i32 = arith.constant 0 : i32
    %0 = arith.cmpi eq, %arg2, %c0_i32 : i32
    %1 = arith.extui %0 : i1 to i32
    %c0_i32_0 = arith.constant 0 : i32
    %2 = arith.cmpi ne, %1, %c0_i32_0 : i32
    scf.if %2 {
      %cst_12 = arith.constant 0.000000e+00 : f32
      %14 = vector.broadcast %cst_12 : f32 to vector<128x128xf32>
      %c0_13 = arith.constant 0 : index
      %c0_14 = arith.constant 0 : index
      %15 = vector.load %arg8[%c0_13, %c0_14] : memref<128x128xf32, #tpu.memory_space<vmem>>, vector<128x128xf32>
      tpu.vector_store %arg8[%c0_13, %c0_14], %14 {strides = array<i32>} : memref<128x128xf32, #tpu.memory_space<vmem>>, vector<128x128xf32>,
    } else {
    }
    %c0 = arith.constant 0 : index
    %c0_1 = arith.constant 0 : index
    %3 = vector.load %arg8[%c0, %c0_1] : memref<128x128xf32, #tpu.memory_space<vmem>>, vector<128x128xf32>
    %c0_2 = arith.constant 0 : index
    %c0_3 = arith.constant 0 : index
    %c0_4 = arith.constant 0 : index
    %4 = vector.load %arg3[%c0_2, %c0_3, %c0_4] : memref<1x128x128xf32, #tpu.memory_space<vmem>>, vector<1x128x128xf32>
    %5 = vector.shape_cast %4 : vector<1x128x128xf32> to vector<128x128xf32>
    %c0_5 = arith.constant 0 : index
    %c0_6 = arith.constant 0 : index
    %c0_7 = arith.constant 0 : index
    %6 = vector.load %arg4[%c0_5, %c0_6, %c0_7] : memref<1x128x128xf32, #tpu.memory_space<vmem>>, vector<1x128x128xf32>
    %7 = vector.shape_cast %6 : vector<1x128x128xf32> to vector<128x128xf32>
    %cst = arith.constant dense<0.000000e+00> : vector<128x128xf32>
    %8 = tpu.matmul %5, %7, %cst {dimension_numbers = #tpu.dot_dimension_numbers<[1], [0], [0], [1], [0, 0, 1, 1], [], []>} : vector<128x128xf32>, vector<128x128xf32>, vector<128x128xf32> -> vector<128x128xf32>
    %9 = arith.addf %3, %8 : vector<128x128xf32>
    %c0_8 = arith.constant 0 : index
    %c0_9 = arith.constant 0 : index
    %10 = vector.load %arg8[%c0_8, %c0_9] : memref<128x128xf32, #tpu.memory_space<vmem>>, vector<128x128xf32>
    tpu.vector_store %arg8[%c0_8, %c0_9], %9 {strides = array<i32>} : memref<128x128xf32, #tpu.memory_space<vmem>>, vector<128x128xf32>,
    %c0_i32_10 = arith.constant 0 : i32
    %11 = arith.cmpi eq, %arg2, %c0_i32_10 : i32
    %12 = arith.extui %11 : i1 to i32
    %c0_i32_11 = arith.constant 0 : i32
    %13 = arith.cmpi ne, %12, %c0_i32_11 : i32
    scf.if %13 {
      %c0_12 = arith.constant 0 : index
      %c0_13 = arith.constant 0 : index
      %c0_14 = arith.constant 0 : index
      %14 = vector.load %arg6[%c0_12, %c0_13, %c0_14] : memref<1x128x1xf32, #tpu.memory_space<vmem>>, vector<1x128x1xf32>
      %15 = vector.shape_cast %14 : vector<1x128x1xf32> to vector<128x1xf32>
      %c0_15 = arith.constant 0 : index
      %c0_16 = arith.constant 0 : index
      %16 = vector.load %arg8[%c0_15, %c0_16] : memref<128x128xf32, #tpu.memory_space<vmem>>, vector<128x128xf32>
      %17 = vector.broadcast %15 : vector<128x1xf32> to vector<128x128xf32>
      %18 = arith.mulf %17, %16 : vector<128x128xf32>
      %c0_17 = arith.constant 0 : index
      %c0_18 = arith.constant 0 : index
      %19 = vector.load %arg5[%c0_17, %c0_18] : memref<128x128xf32, #tpu.memory_space<vmem>>, vector<128x128xf32>
      %cst_19 = arith.constant dense<0.000000e+00> : vector<128x128xf32>
      %20 = tpu.matmul %18, %19, %cst_19 {dimension_numbers = #tpu.dot_dimension_numbers<[1], [0], [0], [1], [0, 0, 1, 1], [], []>} : vector<128x128xf32>, vector<128x128xf32>, vector<128x128xf32> -> vector<128x128xf32>
      %c0_20 = arith.constant 0 : index
      %c0_21 = arith.constant 0 : index
      %c0_22 = arith.constant 0 : index
      %21 = vector.load %arg7[%c0_20, %c0_21, %c0_22] : memref<1x128x128xf32, #tpu.memory_space<vmem>>, vector<1x128x128xf32>
      %22 = vector.shape_cast %21 : vector<1x128x128xf32> to vector<128x128xf32>
      %23 = vector.shape_cast %20 : vector<128x128xf32> to vector<1x128x128xf32>
      tpu.vector_store %arg7[%c0_20, %c0_21, %c0_22], %23 {strides = array<i32>} : memref<1x128x128xf32, #tpu.memory_space<vmem>>, vector<1x128x128xf32>,
    } else {
    }
    return
  }
  func.func @transform_0(%arg0: i32, %arg1: i32, %arg2: i32) -> (i32, i32, i32) {
    %c0_i32 = arith.constant 0 : i32
    return %arg0, %arg1, %arg2 : i32, i32, i32
  }
  func.func @transform_1(%arg0: i32, %arg1: i32, %arg2: i32) -> (i32, i32, i32) {
    %c0_i32 = arith.constant 0 : i32
    %c0_i32_0 = arith.constant 0 : i32
    return %arg0, %arg2, %c0_i32 : i32, i32, i32
  }
  func.func @transform_2(%arg0: i32, %arg1: i32, %arg2: i32) -> (i32, i32) {
    %c0_i32 = arith.constant 0 : i32
    %c0_i32_0 = arith.constant 0 : i32
    %c0_i32_1 = arith.constant 0 : i32
    return %c0_i32, %c0_i32_0 : i32, i32
  }
  func.func @transform_3(%arg0: i32, %arg1: i32, %arg2: i32) -> (i32, i32, i32) {
    %c0_i32 = arith.constant 0 : i32
    %c0_i32_0 = arith.constant 0 : i32
    return %arg0, %arg1, %c0_i32 : i32, i32, i32
  }
  func.func @transform_4(%arg0: i32, %arg1: i32, %arg2: i32) -> (i32, i32, i32) {
    %c0_i32 = arith.constant 0 : i32
    %c0_i32_0 = arith.constant 0 : i32
    return %arg0, %arg1, %c0_i32 : i32, i32, i32
  }
}

</mosaic_0001>

<llo_original>
// kernel: tpu_custom_call.1
$region0: #{tpu_custom_call.1}
  #allocation0 [shape = 'u32[]', space=smem, size = 0x4, offset = 0x4, fixed_abs, tag = 'smem constant byte address 0x4 - core index']
  #allocation1 [shape = 'u32[72,128]{1,0:T(1,128)}', space=vmem, size = 0x9000, scoped, tag = 'internal scratch']
  #allocation2 [shape = 'f32[128,128]{1,0:T(8,128)}', space=vmem, size = 0x10000, scoped, tag = 'scratch operand']
  %s0 = inlined_call_operand.vmem [shape: f32[4,128,128], index: 0, kind: input, shape index: {}]
  %s1 = inlined_call_operand.hbm [shape: f32[4,128,128], index: 1, kind: input, shape index: {}]
  %s2 = inlined_call_operand.hbm [shape: f32[128,128], index: 2, kind: input, shape index: {}]
  %s3 = inlined_call_operand.vmem [shape: f32[4,128,1], index: 3, kind: input, shape index: {}]
  %s4 = inlined_call_operand.hbm [shape: f32[4,128,128], index: 4, kind: output, shape index: {}]
  %s5 = sld [smem:[#allocation0]]
  $region65: #{tpu_custom_call.1} parent=0
    _
  %s7 = ssub.s32 1, %s5
  %s8 = scalar_select 0, %s7, %s5
  $region1: #{tpu_custom_call.1} parent=0
    #allocation3 [shape = 'u8[131072]{0}', space=vmem, size = 0x20000, scoped, tag = 'input window, operand 1']
    #allocation4 [shape = 's32[2]{0}', space=sflag, size = 0x8, scoped, tag = 'scoped memory for tpu_custom_call.1']
    #allocation5 [shape = 's32[2]{0}', space=sflag, size = 0x8, scoped, tag = 'scoped memory for tpu_custom_call.1']
    #allocation6 [shape = 'u8[65536]{0}', space=vmem, size = 0x10000, scoped, tag = 'input window, operand 2, single buffered']
    #allocation7 [shape = 's32[1]{0}', space=sflag, size = 0x4, scoped, tag = 'scoped memory for tpu_custom_call.1']
    #allocation8 [shape = 'u8[131072]{0}', space=vmem, size = 0x20000, scoped, tag = 'output window, operand 0']
    %9 = vsyncpa [#allocation4], 0
    %s10 = scalar_lea.sflag [#allocation4], 1
    %11 = vsyncpa %s10, 0
    %12 = vsyncpa [#allocation7], 0
    %13 = vsyncpa [#allocation5], 0
    %s14 = scalar_lea.sflag [#allocation5], 1
    %15 = vsyncpa %s14, 0
    loop: start=0, step=1, limit=6
    $region2: #{tpu_custom_call.1} parent=1 // loop_pre_header
      _
    $region3: #{tpu_custom_call.1} parent=1 // loop_header
      %s17 = sphi 0, %s21
      %p18 = scmp.ge.s32.totalorder %s17, 6
      %s24 = sphi 0, %s43
      %s25 = sphi 0, %s39
      %s26 = sphi 0, %s35
      %s27 = sphi 0, %s24
      %s28 = sphi 0, %s25
      %s29 = sphi 0, %s26
      %s30 = sphi 0, %s27
      %s31 = sphi 0, %s28
      %s32 = sphi 0, %s29
      %s50 = sphi 0, %s52
      %s53 = sphi 0, %s50
      %s54 = sphi 0, %s53
      %s70 = sphi 0, %s54
      %s78 = sphi 0, %s80
      %s81 = sphi 0, %s78
      %s82 = sphi 0, %s81
      %s98 = sphi 0, %s82
      %s102 = sphi 0, %s102
      %s104 = sphi 0, %s102
      %s105 = sphi 0, %s104
      %s119 = sphi 0, %s105
      %s127 = sphi 0, %s129
      %s130 = sphi 0, %s127
      %s131 = sphi 0, %s130
      %s147 = sphi 0, %s131
      %s155 = sphi 0, %s157
      %s158 = sphi 0, %s155
      %s159 = sphi 0, %s158
      %s175 = sphi 0, %s159
    $region4: #{tpu_custom_call.1} parent=1 // loop_header_branch
      %20 = sbr.rel (%p18) target = $region8
    $region5: #{tpu_custom_call.1} parent=1 // loop_body
      %s22 = ssub.s32 %s17, 1
      %s23 = ssub.s32 %s17, 2
      %s33 = sadd.s32 1, %s26
      %p34 = scmp.ge.s32.totalorder %s33, 1
      %s35 = scalar_select %p34, 0, %s33
      %s36 = sadd.s32 1, %s25
      %s37 = scalar_select %p34, %s36, %s25
      %p38 = scmp.ge.s32.totalorder %s37, 1
      %s39 = scalar_select %p38, 0, %s37
      %s40 = sadd.s32 1, %s24
      %s41 = scalar_select %p38, %s40, %s24
      %p42 = scmp.ge.s32.totalorder %s41, 4
      %s43 = scalar_select %p42, 0, %s41
      %s44 = ssub.s32 %s24, %s43
      %s45 = ssub.s32 %s25, %s39
      %s46 = sor.u32 %s44, %s45
      %s47 = ssub.s32 %s26, %s35
      %s48 = sor.u32 %s46, %s47
      %p49 = scmp.eq.s32.totalorder %s48, 0
      %s51 = sadd.s32 %s50, 1
      %s52 = scalar_select %p49, %s50, %s51
      %p55 = pneg %p49
      %p56 = scmp.eq.s32.totalorder %s17, 3
      %p57 = por %p55, %p56
      %p58 = scmp.ne.s32.totalorder %s50, %s53
      %p59 = scmp.eq.s32.totalorder %s17, 0
      %p60 = por %p58, %p59
      %p61 = scmp.ne.s32.totalorder %s50, %s53
      %p62 = scmp.eq.s32.totalorder %s22, 3
      %p63 = por %p61, %p62
      %p64 = scmp.ne.s32.totalorder %s53, %s54
      %p65 = scmp.eq.s32.totalorder %s22, 0
      %p66 = por %p64, %p65
      %p67 = scmp.ne.s32.totalorder %s53, %s54
      %p68 = scmp.eq.s32.totalorder %s23, 3
      %p69 = por %p67, %p68
      %p71 = scmp.ne.s32.totalorder %s54, %s70
      %p72 = scmp.eq.s32.totalorder %s23, 0
      %p73 = por %p71, %p72
      %s74 = ssub.s32 %s24, %s43
      %s75 = ssub.s32 %s26, %s35
      %s76 = sor.u32 %s74, %s75
      %p77 = scmp.eq.s32.totalorder %s76, 0
      %s79 = sadd.s32 %s78, 1
      %s80 = scalar_select %p77, %s78, %s79
      %p83 = pneg %p77
      %p84 = scmp.eq.s32.totalorder %s17, 3
      %p85 = por %p83, %p84
      %p86 = scmp.ne.s32.totalorder %s78, %s81
      %p87 = scmp.eq.s32.totalorder %s17, 0
      %p88 = por %p86, %p87
      %p89 = scmp.ne.s32.totalorder %s78, %s81
      %p90 = scmp.eq.s32.totalorder %s22, 3
      %p91 = por %p89, %p90
      %p92 = scmp.ne.s32.totalorder %s81, %s82
      %p93 = scmp.eq.s32.totalorder %s22, 0
      %p94 = por %p92, %p93
      %p95 = scmp.ne.s32.totalorder %s81, %s82
      %p96 = scmp.eq.s32.totalorder %s23, 3
      %p97 = por %p95, %p96
      %p99 = scmp.ne.s32.totalorder %s82, %s98
      %p100 = scmp.eq.s32.totalorder %s23, 0
      %p101 = por %p99, %p100
      %s103 = sadd.s32 %s102, 1
      %p106 = scmp.eq.s32.totalorder %s17, 3
      %p107 = scmp.ne.s32.totalorder %s102, %s104
      %p108 = scmp.eq.s32.totalorder %s17, 0
      %p109 = por %p107, %p108
      %p110 = scmp.ne.s32.totalorder %s102, %s104
      %p111 = scmp.eq.s32.totalorder %s22, 3
      %p112 = por %p110, %p111
      %p113 = scmp.ne.s32.totalorder %s104, %s105
      %p114 = scmp.eq.s32.totalorder %s22, 0
      %p115 = por %p113, %p114
      %p116 = scmp.ne.s32.totalorder %s104, %s105
      %p117 = scmp.eq.s32.totalorder %s23, 3
      %p118 = por %p116, %p117
      %p120 = scmp.ne.s32.totalorder %s105, %s119
      %p121 = scmp.eq.s32.totalorder %s23, 0
      %p122 = por %p120, %p121
      %s123 = ssub.s32 %s24, %s43
      %s124 = ssub.s32 %s25, %s39
      %s125 = sor.u32 %s123, %s124
      %p126 = scmp.eq.s32.totalorder %s125, 0
      %s128 = sadd.s32 %s127, 1
      %s129 = scalar_select %p126, %s127, %s128
      %p132 = pneg %p126
      %p133 = scmp.eq.s32.totalorder %s17, 3
      %p134 = por %p132, %p133
      %p135 = scmp.ne.s32.totalorder %s127, %s130
      %p136 = scmp.eq.s32.totalorder %s17, 0
      %p137 = por %p135, %p136
      %p138 = scmp.ne.s32.totalorder %s127, %s130
      %p139 = scmp.eq.s32.totalorder %s22, 3
      %p140 = por %p138, %p139
      %p141 = scmp.ne.s32.totalorder %s130, %s131
      %p142 = scmp.eq.s32.totalorder %s22, 0
      %p143 = por %p141, %p142
      %p144 = scmp.ne.s32.totalorder %s130, %s131
      %p145 = scmp.eq.s32.totalorder %s23, 3
      %p146 = por %p144, %p145
      %p148 = scmp.ne.s32.totalorder %s131, %s147
      %p149 = scmp.eq.s32.totalorder %s23, 0
      %p150 = por %p148, %p149
      %s151 = ssub.s32 %s24, %s43
      %s152 = ssub.s32 %s25, %s39
      %s153 = sor.u32 %s151, %s152
      %p154 = scmp.eq.s32.totalorder %s153, 0
      %s156 = sadd.s32 %s155, 1
      %s157 = scalar_select %p154, %s155, %s156
      %p160 = pneg %p154
      %p161 = scmp.eq.s32.totalorder %s17, 3
      %p162 = por %p160, %p161
      %p163 = scmp.ne.s32.totalorder %s155, %s158
      %p164 = scmp.eq.s32.totalorder %s17, 0
      %p165 = por %p163, %p164
      %p166 = scmp.ne.s32.totalorder %s155, %s158
      %p167 = scmp.eq.s32.totalorder %s22, 3
      %p168 = por %p166, %p167
      %p169 = scmp.ne.s32.totalorder %s158, %s159
      %p170 = scmp.eq.s32.totalorder %s22, 0
      %p171 = por %p169, %p170
      %p172 = scmp.ne.s32.totalorder %s158, %s159
      %p173 = scmp.eq.s32.totalorder %s23, 3
      %p174 = por %p172, %p173
      %p176 = scmp.ne.s32.totalorder %s159, %s175
      %p177 = scmp.eq.s32.totalorder %s23, 0
      %p178 = por %p176, %p177
      %p179 = scmp.le.s32.totalorder 1, %s17
      %p180 = scmp.lt.s32.totalorder %s17, 5
      %p181 = pnand %p179, %p180
      %p182 = pneg %p181
      // Predicated region
      $region9: #{tpu_custom_call.1} parent=5 // pred_check
        _
      $region10: #{tpu_custom_call.1} parent=5 // pred_check_branch
        %184 = sbr.rel (%p181) target = $region12
      $region11: #{tpu_custom_call.1} parent=5 // pred_region
        %s185 = ssub.s32 %s17, 1
        // Predicated region
        $region13: #{tpu_custom_call.1} parent=11 // pred_check
          %p186 = pneg %p115
        $region14: #{tpu_custom_call.1} parent=11 // pred_check_branch
          %188 = sbr.rel (%p186) target = $region16
        $region15: #{tpu_custom_call.1} parent=11 // pred_region
          %190 = vsyncadd [#allocation7], 0
          %s191 = sshll.u32 %s2, 4
          %s192 = int_to_ptr.hbm [resolvable:$true] %s191
          %s193 = sshll.u32 [#allocation6], 4
          %s194 = int_to_ptr.vmem [resolvable:$true] %s193
          %199 = dma.hbm_to_vmem [thread:$0]  %s192, 2048, %s194, [#allocation7], 128, 128, 8
        $region16: #{tpu_custom_call.1} parent=11 // pred_fallthru
          _
      $region12: #{tpu_custom_call.1} parent=5 // pred_fallthru
        _
      %p200 = scmp.lt.s32.totalorder %s17, 4
      // Predicated region
      $region17: #{tpu_custom_call.1} parent=5 // pred_check
        %p201 = pneg %p200
      $region18: #{tpu_custom_call.1} parent=5 // pred_check_branch
        %203 = sbr.rel (%p201) target = $region20
      $region19: #{tpu_custom_call.1} parent=5 // pred_region
        // Predicated region
        $region21: #{tpu_custom_call.1} parent=19 // pred_check
          %p204 = pneg %p60
        $region22: #{tpu_custom_call.1} parent=19 // pred_check_branch
          %206 = sbr.rel (%p204) target = $region24
        $region23: #{tpu_custom_call.1} parent=19 // pred_region
          %s207 = smul.u32 16, %s25
          %p208 = scmp.lt.s32.totalorder %s24, 3
          %s209 = scalar_select %p208, %s24, 3
          %p210 = scmp.lt.s32.totalorder %s207, 15
          %s211 = scalar_select %p210, %s207, 15
          %p212 = scmp.lt.s32.totalorder %s26, 0
          %s213 = scalar_select %p212, %s26, 0
          %s214 = sadd.s32 %s213, %s211
          %s215 = smul.addr %s209, 16
          %s216 = sadd.s32 %s214, %s215
          %s217 = smul.addr %s216, 8
          %s218 = scalar_lea.vmem %s0, %s217
          %s219 = smul.u32 16, %s25
        $region24: #{tpu_custom_call.1} parent=19 // pred_fallthru
          _
        // Predicated region
        $region25: #{tpu_custom_call.1} parent=19 // pred_check
          %p220 = pneg %p88
        $region26: #{tpu_custom_call.1} parent=19 // pred_check_branch
          %222 = sbr.rel (%p220) target = $region28
        $region27: #{tpu_custom_call.1} parent=19 // pred_region
          %s223 = sand.u32 %s78, 1
          %s224 = scalar_lea.sflag [#allocation4], %s223
          %s225 = sand.u32 %s78, 1
          %s226 = smul.addr %s225, 128
          %s227 = scalar_lea.vmem [#allocation3], %s226
          %s228 = smul.u32 16, %s26
          %230 = vsyncadd %s224, 0
          %s231 = smul.addr %s24, 16
          %s232 = sadd.s32 %s228, %s231
          %s233 = smul.addr %s232, 8
          %s234 = scalar_lea.hbm %s1, %s233
          %s235 = sshll.u32 %s234, 4
          %s236 = int_to_ptr.hbm [resolvable:$true] %s235
          %s237 = sshll.u32 %s227, 4
          %s238 = int_to_ptr.vmem [resolvable:$true] %s237
          %243 = dma.hbm_to_vmem [thread:$0]  %s236, 2048, %s238, %s224, 128, 128, 8
        $region28: #{tpu_custom_call.1} parent=19 // pred_fallthru
          _
        // Predicated region
        $region29: #{tpu_custom_call.1} parent=19 // pred_check
          %p244 = pneg %p137
        $region30: #{tpu_custom_call.1} parent=19 // pred_check_branch
          %246 = sbr.rel (%p244) target = $region32
        $region31: #{tpu_custom_call.1} parent=19 // pred_region
          %s247 = smul.u32 16, %s25
          %p248 = scmp.lt.s32.totalorder %s24, 3
          %s249 = scalar_select %p248, %s24, 3
          %p250 = scmp.lt.s32.totalorder %s247, 15
          %s251 = scalar_select %p250, %s247, 15
          %s252 = smul.addr %s249, 16
          %s253 = sadd.s32 %s251, %s252
          %s254 = smul.addr %s253, 8
          %s255 = scalar_lea.vmem %s3, %s254
          %s256 = smul.u32 16, %s25
        $region32: #{tpu_custom_call.1} parent=19 // pred_fallthru
          _
      $region20: #{tpu_custom_call.1} parent=5 // pred_fallthru
        _
      %p257 = scmp.le.s32.totalorder 1, %s17
      %p258 = scmp.lt.s32.totalorder %s17, 5
      %p259 = pnand %p257, %p258
      %p260 = pneg %p259
      // Predicated region
      $region33: #{tpu_custom_call.1} parent=5 // pred_check
        _
      $region34: #{tpu_custom_call.1} parent=5 // pred_check_branch
        %262 = sbr.rel (%p259) target = $region36
      $region35: #{tpu_custom_call.1} parent=5 // pred_region
        %s263 = ssub.s32 %s17, 1
        %s264 = sand.u32 %s81, 1
        %s265 = scalar_lea.sflag [#allocation4], %s264
        %s266 = sand.u32 %s81, 1
        %s267 = smul.addr %s266, 128
        %s268 = scalar_lea.vmem [#allocation3], %s267
        // Predicated region
        $region37: #{tpu_custom_call.1} parent=35 // pred_check
          %p269 = pneg %p94
        $region38: #{tpu_custom_call.1} parent=35 // pred_check_branch
          %271 = sbr.rel (%p269) target = $region40
        $region39: #{tpu_custom_call.1} parent=35 // pred_region
          %273 = dma.done %s265, 2048
        $region40: #{tpu_custom_call.1} parent=35 // pred_fallthru
          _
        // Predicated region
        $region41: #{tpu_custom_call.1} parent=35 // pred_check
          %p274 = pneg %p115
        $region42: #{tpu_custom_call.1} parent=35 // pred_check_branch
          %276 = sbr.rel (%p274) target = $region44
        $region43: #{tpu_custom_call.1} parent=35 // pred_region
          %278 = dma.done [#allocation7], 2048
        $region44: #{tpu_custom_call.1} parent=35 // pred_fallthru
          _
        %s279 = smul.u32 16, %s28
        %p280 = scmp.lt.s32.totalorder %s27, 3
        %s281 = scalar_select %p280, %s27, 3
        %p282 = scmp.lt.s32.totalorder %s279, 15
        %s283 = scalar_select %p282, %s279, 15
        %p284 = scmp.lt.s32.totalorder %s29, 0
        %s285 = scalar_select %p284, %s29, 0
        %s286 = sadd.s32 %s285, %s283
        %s287 = smul.addr %s281, 16
        %s288 = sadd.s32 %s286, %s287
        %s289 = smul.addr %s288, 8
        %s290 = scalar_lea.vmem %s0, %s289
        %p291 = pneg %p66
        %p292 = pneg %p63
        %s293 = sand.u32 %s81, 1
        %s294 = scalar_lea.sflag [#allocation4], %s293
        %s295 = sand.u32 %s81, 1
        %s296 = smul.addr %s295, 128
        %s297 = scalar_lea.vmem [#allocation3], %s296
        %p298 = pneg %p94
        %p299 = pneg %p91
        %p300 = pneg %p115
        %p301 = pneg %p112
        %s302 = smul.u32 16, %s28
        %p303 = scmp.lt.s32.totalorder %s27, 3
        %s304 = scalar_select %p303, %s27, 3
        %p305 = scmp.lt.s32.totalorder %s302, 15
        %s306 = scalar_select %p305, %s302, 15
        %s307 = smul.addr %s304, 16
        %s308 = sadd.s32 %s306, %s307
        %s309 = smul.addr %s308, 8
        %s310 = scalar_lea.vmem %s3, %s309
        %p311 = pneg %p143
        %p312 = pneg %p140
        %p313 = pneg %p171
        %p314 = pneg %p168
        %s315 = sand.u32 %s158, 1
        %s316 = scalar_lea.sflag [#allocation5], %s315
        %s317 = sand.u32 %s158, 1
        %s318 = smul.addr %s317, 128
        %s319 = scalar_lea.vmem [#allocation8], %s318
        %s320 = smul.u32 16, %s28
        %p321 = scmp.lt.s32.totalorder %s27, 3
        %s322 = scalar_select %p321, %s27, 3
        %p323 = scmp.lt.s32.totalorder %s320, 15
        %s324 = scalar_select %p323, %s320, 15
        %p325 = scmp.lt.s32.totalorder %s29, 0
        %s326 = scalar_select %p325, %s29, 0
        %s327 = sadd.s32 %s326, %s324
        %s328 = smul.addr %s322, 16
        %s329 = sadd.s32 %s327, %s328
        %s330 = smul.addr %s329, 8
        %s331 = scalar_lea.vmem %s0, %s330
        %s332 = smul.u32 16, %s28
        %s333 = smul.u32 16, %s29
        %s334 = smul.u32 16, %s28
        %p335 = scmp.lt.s32.totalorder %s27, 3
        %s336 = scalar_select %p335, %s27, 3
        %p337 = scmp.lt.s32.totalorder %s334, 15
        %s338 = scalar_select %p337, %s334, 15
        %s339 = smul.addr %s336, 16
        %s340 = sadd.s32 %s338, %s339
        %s341 = smul.addr %s340, 8
        %s342 = scalar_lea.vmem %s3, %s341
        %s343 = smul.u32 16, %s28
        %s344 = smul.u32 16, %s28
        %p345 = scmp.eq.s32.totalorder %s29, 0
        // Predicated region
        $region45: #{tpu_custom_call.1} parent=35 // pred_check
          %p346 = pneg %p345
        $region46: #{tpu_custom_call.1} parent=35 // pred_check_branch
          %348 = sbr.rel (%p346) target = $region48
        $region47: #{tpu_custom_call.1} parent=35 // pred_region
          %349 = vst [vmem:[#allocation2] sm:$0xff] 0.0
          %350 = vst [vmem:[#allocation2 + $0x8] sm:$0xff] 0.0
          %351 = vst [vmem:[#allocation2 + $0x10] sm:$0xff] 0.0
          %352 = vst [vmem:[#allocation2 + $0x18] sm:$0xff] 0.0
          %353 = vst [vmem:[#allocation2 + $0x20] sm:$0xff] 0.0
          %354 = vst [vmem:[#allocation2 + $0x28] sm:$0xff] 0.0
          %355 = vst [vmem:[#allocation2 + $0x30] sm:$0xff] 0.0
          %356 = vst [vmem:[#allocation2 + $0x38] sm:$0xff] 0.0
          %357 = vst [vmem:[#allocation2 + $0x40] sm:$0xff] 0.0
          %358 = vst [vmem:[#allocation2 + $0x48] sm:$0xff] 0.0
          %359 = vst [vmem:[#allocation2 + $0x50] sm:$0xff] 0.0
          %360 = vst [vmem:[#allocation2 + $0x58] sm:$0xff] 0.0
          %361 = vst [vmem:[#allocation2 + $0x60] sm:$0xff] 0.0
          %362 = vst [vmem:[#allocation2 + $0x68] sm:$0xff] 0.0
          %363 = vst [vmem:[#allocation2 + $0x70] sm:$0xff] 0.0
          %364 = vst [vmem:[#allocation2 + $0x78] sm:$0xff] 0.0
        $region48: #{tpu_custom_call.1} parent=35 // pred_fallthru
          _
        %v365 = vld [vmem:[#allocation2] sm:$0xff]
        %v366 = vld [vmem:[#allocation2 + $0x8] sm:$0xff]
        %v367 = vld [vmem:[#allocation2 + $0x10] sm:$0xff]
        %v368 = vld [vmem:[#allocation2 + $0x18] sm:$0xff]
        %v369 = vld [vmem:[#allocation2 + $0x20] sm:$0xff]
        %v370 = vld [vmem:[#allocation2 + $0x28] sm:$0xff]
        %v371 = vld [vmem:[#allocation2 + $0x30] sm:$0xff]
        %v372 = vld [vmem:[#allocation2 + $0x38] sm:$0xff]
        %v373 = vld [vmem:[#allocation2 + $0x40] sm:$0xff]
        %v374 = vld [vmem:[#allocation2 + $0x48] sm:$0xff]
        %v375 = vld [vmem:[#allocation2 + $0x50] sm:$0xff]
        %v376 = vld [vmem:[#allocation2 + $0x58] sm:$0xff]
        %v377 = vld [vmem:[#allocation2 + $0x60] sm:$0xff]
        %v378 = vld [vmem:[#allocation2 + $0x68] sm:$0xff]
        %v379 = vld [vmem:[#allocation2 + $0x70] sm:$0xff]
        %v380 = vld [vmem:[#allocation2 + $0x78] sm:$0xff]
        %v381 = vld [vmem:[%s331] sm:$0xff]
        %v382 = vld [vmem:[%s331 + $0x8] sm:$0xff]
        %v383 = vld [vmem:[%s331 + $0x10] sm:$0xff]
        %v384 = vld [vmem:[%s331 + $0x18] sm:$0xff]
        %v385 = vld [vmem:[%s331 + $0x20] sm:$0xff]
        %v386 = vld [vmem:[%s331 + $0x28] sm:$0xff]
        %v387 = vld [vmem:[%s331 + $0x30] sm:$0xff]
        %v388 = vld [vmem:[%s331 + $0x38] sm:$0xff]
        %v389 = vld [vmem:[%s331 + $0x40] sm:$0xff]
        %v390 = vld [vmem:[%s331 + $0x48] sm:$0xff]
        %v391 = vld [vmem:[%s331 + $0x50] sm:$0xff]
        %v392 = vld [vmem:[%s331 + $0x58] sm:$0xff]
        %v393 = vld [vmem:[%s331 + $0x60] sm:$0xff]
        %v394 = vld [vmem:[%s331 + $0x68] sm:$0xff]
        %v395 = vld [vmem:[%s331 + $0x70] sm:$0xff]
        %v396 = vld [vmem:[%s331 + $0x78] sm:$0xff]
        %v397 = vld [vmem:[%s268] sm:$0xff]
        %v398 = vld [vmem:[%s268 + $0x8] sm:$0xff]
        %v399 = vld [vmem:[%s268 + $0x10] sm:$0xff]
        %v400 = vld [vmem:[%s268 + $0x18] sm:$0xff]
        %v401 = vld [vmem:[%s268 + $0x20] sm:$0xff]
        %v402 = vld [vmem:[%s268 + $0x28] sm:$0xff]
        %v403 = vld [vmem:[%s268 + $0x30] sm:$0xff]
        %v404 = vld [vmem:[%s268 + $0x38] sm:$0xff]
        %v405 = vld [vmem:[%s268 + $0x40] sm:$0xff]
        %v406 = vld [vmem:[%s268 + $0x48] sm:$0xff]
        %v407 = vld [vmem:[%s268 + $0x50] sm:$0xff]
        %v408 = vld [vmem:[%s268 + $0x58] sm:$0xff]
        %v409 = vld [vmem:[%s268 + $0x60] sm:$0xff]
        %v410 = vld [vmem:[%s268 + $0x68] sm:$0xff]
        %v411 = vld [vmem:[%s268 + $0x70] sm:$0xff]
        %v412 = vld [vmem:[%s268 + $0x78] sm:$0xff]
        %413 = vmatpush.msra.mxu0 %v412
        %414 = vmatpush.msra.mxu0 %v411
        %415 = vmatpush.msra.mxu0 %v410
        %416 = vmatpush.msra.mxu0 %v409
        %417 = vmatpush.msra.mxu0 %v408
        %418 = vmatpush.msra.mxu0 %v407
        %419 = vmatpush.msra.mxu0 %v406
        %420 = vmatpush.msra.mxu0 %v405
        %421 = vmatpush.msra.mxu0 %v404
        %422 = vmatpush.msra.mxu0 %v403
        %423 = vmatpush.msra.mxu0 %v402
        %424 = vmatpush.msra.mxu0 %v401
        %425 = vmatpush.msra.mxu0 %v400
        %426 = vmatpush.msra.mxu0 %v399
        %427 = vmatpush.msra.mxu0 %v398
        %428 = vmatpush.msra.mxu0 %v397
        %429 = vmatmul.f32.gmra.mxu0 %v381
        %v430 = vpop.f32.mrf.mxu0
        %v431 = vadd.f32 0.0, %v430
        %432 = vmatmul.f32.gmra.mxu0 %v382
        %v433 = vpop.f32.mrf.mxu0
        %v434 = vadd.f32 0.0, %v433
        %435 = vmatmul.f32.gmra.mxu0 %v383
        %v436 = vpop.f32.mrf.mxu0
        %v437 = vadd.f32 0.0, %v436
        %438 = vmatmul.f32.gmra.mxu0 %v384
        %v439 = vpop.f32.mrf.mxu0
        %v440 = vadd.f32 0.0, %v439
        %441 = vmatmul.f32.gmra.mxu0 %v385
        %v442 = vpop.f32.mrf.mxu0
        %v443 = vadd.f32 0.0, %v442
        %444 = vmatmul.f32.gmra.mxu0 %v386
        %v445 = vpop.f32.mrf.mxu0
        %v446 = vadd.f32 0.0, %v445
        %447 = vmatmul.f32.gmra.mxu0 %v387
        %v448 = vpop.f32.mrf.mxu0
        %v449 = vadd.f32 0.0, %v448
        %450 = vmatmul.f32.gmra.mxu0 %v388
        %v451 = vpop.f32.mrf.mxu0
        %v452 = vadd.f32 0.0, %v451
        %453 = vmatmul.f32.gmra.mxu0 %v389
        %v454 = vpop.f32.mrf.mxu0
        %v455 = vadd.f32 0.0, %v454
        %456 = vmatmul.f32.gmra.mxu0 %v390
        %v457 = vpop.f32.mrf.mxu0
        %v458 = vadd.f32 0.0, %v457
        %459 = vmatmul.f32.gmra.mxu0 %v391
        %v460 = vpop.f32.mrf.mxu0
        %v461 = vadd.f32 0.0, %v460
        %462 = vmatmul.f32.gmra.mxu0 %v392
        %v463 = vpop.f32.mrf.mxu0
        %v464 = vadd.f32 0.0, %v463
        %465 = vmatmul.f32.gmra.mxu0 %v393
        %v466 = vpop.f32.mrf.mxu0
        %v467 = vadd.f32 0.0, %v466
        %468 = vmatmul.f32.gmra.mxu0 %v394
        %v469 = vpop.f32.mrf.mxu0
        %v470 = vadd.f32 0.0, %v469
        %471 = vmatmul.f32.gmra.mxu0 %v395
        %v472 = vpop.f32.mrf.mxu0
        %v473 = vadd.f32 0.0, %v472
        %474 = vmatmul.f32.gmra.mxu0 %v396
        %v475 = vpop.f32.mrf.mxu0
        %v476 = vadd.f32 0.0, %v475
        %477 = vdwg.mxu0
        %v478 = vadd.f32 %v365, %v431
        %v479 = vadd.f32 %v366, %v434
        %v480 = vadd.f32 %v367, %v437
        %v481 = vadd.f32 %v368, %v440
        %v482 = vadd.f32 %v369, %v443
        %v483 = vadd.f32 %v370, %v446
        %v484 = vadd.f32 %v371, %v449
        %v485 = vadd.f32 %v372, %v452
        %v486 = vadd.f32 %v373, %v455
        %v487 = vadd.f32 %v374, %v458
        %v488 = vadd.f32 %v375, %v461
        %v489 = vadd.f32 %v376, %v464
        %v490 = vadd.f32 %v377, %v467
        %v491 = vadd.f32 %v378, %v470
        %v492 = vadd.f32 %v379, %v473
        %v493 = vadd.f32 %v380, %v476
        %494 = vst [vmem:[#allocation2] sm:$0xff] %v478
        %495 = vst [vmem:[#allocation2 + $0x8] sm:$0xff] %v479
        %496 = vst [vmem:[#allocation2 + $0x10] sm:$0xff] %v480
        %497 = vst [vmem:[#allocation2 + $0x18] sm:$0xff] %v481
        %498 = vst [vmem:[#allocation2 + $0x20] sm:$0xff] %v482
        %499 = vst [vmem:[#allocation2 + $0x28] sm:$0xff] %v483
        %500 = vst [vmem:[#allocation2 + $0x30] sm:$0xff] %v484
        %501 = vst [vmem:[#allocation2 + $0x38] sm:$0xff] %v485
        %502 = vst [vmem:[#allocation2 + $0x40] sm:$0xff] %v486
        %503 = vst [vmem:[#allocation2 + $0x48] sm:$0xff] %v487
        %504 = vst [vmem:[#allocation2 + $0x50] sm:$0xff] %v488
        %505 = vst [vmem:[#allocation2 + $0x58] sm:$0xff] %v489
        %506 = vst [vmem:[#allocation2 + $0x60] sm:$0xff] %v490
        %507 = vst [vmem:[#allocation2 + $0x68] sm:$0xff] %v491
        %508 = vst [vmem:[#allocation2 + $0x70] sm:$0xff] %v492
        %509 = vst [vmem:[#allocation2 + $0x78] sm:$0xff] %v493
        // Predicated region
        $region49: #{tpu_custom_call.1} parent=35 // pred_check
          %p510 = pneg %p345
        $region50: #{tpu_custom_call.1} parent=35 // pred_check_branch
          %512 = sbr.rel (%p510) target = $region52
        $region51: #{tpu_custom_call.1} parent=35 // pred_region
          %v513 = vld [vmem:[%s342] sm:$0xff]
          %v514 = vld [vmem:[%s342 + $0x8] sm:$0xff]
          %v515 = vld [vmem:[%s342 + $0x10] sm:$0xff]
          %v516 = vld [vmem:[%s342 + $0x18] sm:$0xff]
          %v517 = vld [vmem:[%s342 + $0x20] sm:$0xff]
          %v518 = vld [vmem:[%s342 + $0x28] sm:$0xff]
          %v519 = vld [vmem:[%s342 + $0x30] sm:$0xff]
          %v520 = vld [vmem:[%s342 + $0x38] sm:$0xff]
          %v521 = vld [vmem:[%s342 + $0x40] sm:$0xff]
          %v522 = vld [vmem:[%s342 + $0x48] sm:$0xff]
          %v523 = vld [vmem:[%s342 + $0x50] sm:$0xff]
          %v524 = vld [vmem:[%s342 + $0x58] sm:$0xff]
          %v525 = vld [vmem:[%s342 + $0x60] sm:$0xff]
          %v526 = vld [vmem:[%s342 + $0x68] sm:$0xff]
          %v527 = vld [vmem:[%s342 + $0x70] sm:$0xff]
          %v528 = vld [vmem:[%s342 + $0x78] sm:$0xff]
          %v529 = vld [vmem:[#allocation2] sm:$0xff]
          %v530 = vld [vmem:[#allocation2 + $0x8] sm:$0xff]
          %v531 = vld [vmem:[#allocation2 + $0x10] sm:$0xff]
          %v532 = vld [vmem:[#allocation2 + $0x18] sm:$0xff]
          %v533 = vld [vmem:[#allocation2 + $0x20] sm:$0xff]
          %v534 = vld [vmem:[#allocation2 + $0x28] sm:$0xff]
          %v535 = vld [vmem:[#allocation2 + $0x30] sm:$0xff]
          %v536 = vld [vmem:[#allocation2 + $0x38] sm:$0xff]
          %v537 = vld [vmem:[#allocation2 + $0x40] sm:$0xff]
          %v538 = vld [vmem:[#allocation2 + $0x48] sm:$0xff]
          %v539 = vld [vmem:[#allocation2 + $0x50] sm:$0xff]
          %v540 = vld [vmem:[#allocation2 + $0x58] sm:$0xff]
          %v541 = vld [vmem:[#allocation2 + $0x60] sm:$0xff]
          %v542 = vld [vmem:[#allocation2 + $0x68] sm:$0xff]
          %v543 = vld [vmem:[#allocation2 + $0x70] sm:$0xff]
          %v544 = vld [vmem:[#allocation2 + $0x78] sm:$0xff]
          %546 = vset.pattern.permute.xlu0 0
          %547 = vperm.xlu0 %546, %v513
          %v548 = vpop.permute.xlu0 %547
          %551 = vset.pattern.permute.xlu0 0
          %552 = vperm.xlu0 %551, %v514
          %v553 = vpop.permute.xlu0 %552
          %556 = vset.pattern.permute.xlu0 0
          %557 = vperm.xlu0 %556, %v515
          %v558 = vpop.permute.xlu0 %557
          %561 = vset.pattern.permute.xlu0 0
          %562 = vperm.xlu0 %561, %v516
          %v563 = vpop.permute.xlu0 %562
          %566 = vset.pattern.permute.xlu0 0
          %567 = vperm.xlu0 %566, %v517
          %v568 = vpop.permute.xlu0 %567
          %571 = vset.pattern.permute.xlu0 0
          %572 = vperm.xlu0 %571, %v518
          %v573 = vpop.permute.xlu0 %572
          %576 = vset.pattern.permute.xlu0 0
          %577 = vperm.xlu0 %576, %v519
          %v578 = vpop.permute.xlu0 %577
          %581 = vset.pattern.permute.xlu0 0
          %582 = vperm.xlu0 %581, %v520
          %v583 = vpop.permute.xlu0 %582
          %586 = vset.pattern.permute.xlu0 0
          %587 = vperm.xlu0 %586, %v521
          %v588 = vpop.permute.xlu0 %587
          %591 = vset.pattern.permute.xlu0 0
          %592 = vperm.xlu0 %591, %v522
          %v593 = vpop.permute.xlu0 %592
          %596 = vset.pattern.permute.xlu0 0
          %597 = vperm.xlu0 %596, %v523
          %v598 = vpop.permute.xlu0 %597
          %601 = vset.pattern.permute.xlu0 0
          %602 = vperm.xlu0 %601, %v524
          %v603 = vpop.permute.xlu0 %602
          %606 = vset.pattern.permute.xlu0 0
          %607 = vperm.xlu0 %606, %v525
          %v608 = vpop.permute.xlu0 %607
          %611 = vset.pattern.permute.xlu0 0
          %612 = vperm.xlu0 %611, %v526
          %v613 = vpop.permute.xlu0 %612
          %616 = vset.pattern.permute.xlu0 0
          %617 = vperm.xlu0 %616, %v527
          %v618 = vpop.permute.xlu0 %617
          %621 = vset.pattern.permute.xlu0 0
          %622 = vperm.xlu0 %621, %v528
          %v623 = vpop.permute.xlu0 %622
          %v625 = vmul.f32 %v548, %v529
          %v626 = vmul.f32 %v553, %v530
          %v627 = vmul.f32 %v558, %v531
          %v628 = vmul.f32 %v563, %v532
          %v629 = vmul.f32 %v568, %v533
          %v630 = vmul.f32 %v573, %v534
          %v631 = vmul.f32 %v578, %v535
          %v632 = vmul.f32 %v583, %v536
          %v633 = vmul.f32 %v588, %v537
          %v634 = vmul.f32 %v593, %v538
          %v635 = vmul.f32 %v598, %v539
          %v636 = vmul.f32 %v603, %v540
          %v637 = vmul.f32 %v608, %v541
          %v638 = vmul.f32 %v613, %v542
          %v639 = vmul.f32 %v618, %v543
          %v640 = vmul.f32 %v623, %v544
          %v641 = vld [vmem:[#allocation6] sm:$0xff]
          %v642 = vld [vmem:[#allocation6 + $0x8] sm:$0xff]
          %v643 = vld [vmem:[#allocation6 + $0x10] sm:$0xff]
          %v644 = vld [vmem:[#allocation6 + $0x18] sm:$0xff]
          %v645 = vld [vmem:[#allocation6 + $0x20] sm:$0xff]
          %v646 = vld [vmem:[#allocation6 + $0x28] sm:$0xff]
          %v647 = vld [vmem:[#allocation6 + $0x30] sm:$0xff]
          %v648 = vld [vmem:[#allocation6 + $0x38] sm:$0xff]
          %v649 = vld [vmem:[#allocation6 + $0x40] sm:$0xff]
          %v650 = vld [vmem:[#allocation6 + $0x48] sm:$0xff]
          %v651 = vld [vmem:[#allocation6 + $0x50] sm:$0xff]
          %v652 = vld [vmem:[#allocation6 + $0x58] sm:$0xff]
          %v653 = vld [vmem:[#allocation6 + $0x60] sm:$0xff]
          %v654 = vld [vmem:[#allocation6 + $0x68] sm:$0xff]
          %v655 = vld [vmem:[#allocation6 + $0x70] sm:$0xff]
          %v656 = vld [vmem:[#allocation6 + $0x78] sm:$0xff]
          %657 = vmatpush.msra.mxu0 %v656
          %658 = vmatpush.msra.mxu0 %v655
          %659 = vmatpush.msra.mxu0 %v654
          %660 = vmatpush.msra.mxu0 %v653
          %661 = vmatpush.msra.mxu0 %v652
          %662 = vmatpush.msra.mxu0 %v651
          %663 = vmatpush.msra.mxu0 %v650
          %664 = vmatpush.msra.mxu0 %v649
          %665 = vmatpush.msra.mxu0 %v648
          %666 = vmatpush.msra.mxu0 %v647
          %667 = vmatpush.msra.mxu0 %v646
          %668 = vmatpush.msra.mxu0 %v645
          %669 = vmatpush.msra.mxu0 %v644
          %670 = vmatpush.msra.mxu0 %v643
          %671 = vmatpush.msra.mxu0 %v642
          %672 = vmatpush.msra.mxu0 %v641
          %673 = vmatmul.f32.gmra.mxu0 %v625
          %v674 = vpop.f32.mrf.mxu0
          %v675 = vadd.f32 0.0, %v674
          %676 = vmatmul.f32.gmra.mxu0 %v626
          %v677 = vpop.f32.mrf.mxu0
          %v678 = vadd.f32 0.0, %v677
          %679 = vmatmul.f32.gmra.mxu0 %v627
          %v680 = vpop.f32.mrf.mxu0
          %v681 = vadd.f32 0.0, %v680
          %682 = vmatmul.f32.gmra.mxu0 %v628
          %v683 = vpop.f32.mrf.mxu0
          %v684 = vadd.f32 0.0, %v683
          %685 = vmatmul.f32.gmra.mxu0 %v629
          %v686 = vpop.f32.mrf.mxu0
          %v687 = vadd.f32 0.0, %v686
          %688 = vmatmul.f32.gmra.mxu0 %v630
          %v689 = vpop.f32.mrf.mxu0
          %v690 = vadd.f32 0.0, %v689
          %691 = vmatmul.f32.gmra.mxu0 %v631
          %v692 = vpop.f32.mrf.mxu0
          %v693 = vadd.f32 0.0, %v692
          %694 = vmatmul.f32.gmra.mxu0 %v632
          %v695 = vpop.f32.mrf.mxu0
          %v696 = vadd.f32 0.0, %v695
          %697 = vmatmul.f32.gmra.mxu0 %v633
          %v698 = vpop.f32.mrf.mxu0
          %v699 = vadd.f32 0.0, %v698
          %700 = vmatmul.f32.gmra.mxu0 %v634
          %v701 = vpop.f32.mrf.mxu0
          %v702 = vadd.f32 0.0, %v701
          %703 = vmatmul.f32.gmra.mxu0 %v635
          %v704 = vpop.f32.mrf.mxu0
          %v705 = vadd.f32 0.0, %v704
          %706 = vmatmul.f32.gmra.mxu0 %v636
          %v707 = vpop.f32.mrf.mxu0
          %v708 = vadd.f32 0.0, %v707
          %709 = vmatmul.f32.gmra.mxu0 %v637
          %v710 = vpop.f32.mrf.mxu0
          %v711 = vadd.f32 0.0, %v710
          %712 = vmatmul.f32.gmra.mxu0 %v638
          %v713 = vpop.f32.mrf.mxu0
          %v714 = vadd.f32 0.0, %v713
          %715 = vmatmul.f32.gmra.mxu0 %v639
          %v716 = vpop.f32.mrf.mxu0
          %v717 = vadd.f32 0.0, %v716
          %718 = vmatmul.f32.gmra.mxu0 %v640
          %v719 = vpop.f32.mrf.mxu0
          %v720 = vadd.f32 0.0, %v719
          %721 = vdwg.mxu0
          %722 = vst [vmem:[%s319] sm:$0xff] %v675
          %723 = vst [vmem:[%s319 + $0x8] sm:$0xff] %v678
          %724 = vst [vmem:[%s319 + $0x10] sm:$0xff] %v681
          %725 = vst [vmem:[%s319 + $0x18] sm:$0xff] %v684
          %726 = vst [vmem:[%s319 + $0x20] sm:$0xff] %v687
          %727 = vst [vmem:[%s319 + $0x28] sm:$0xff] %v690
          %728 = vst [vmem:[%s319 + $0x30] sm:$0xff] %v693
          %729 = vst [vmem:[%s319 + $0x38] sm:$0xff] %v696
          %730 = vst [vmem:[%s319 + $0x40] sm:$0xff] %v699
          %731 = vst [vmem:[%s319 + $0x48] sm:$0xff] %v702
          %732 = vst [vmem:[%s319 + $0x50] sm:$0xff] %v705
          %733 = vst [vmem:[%s319 + $0x58] sm:$0xff] %v708
          %734 = vst [vmem:[%s319 + $0x60] sm:$0xff] %v711
          %735 = vst [vmem:[%s319 + $0x68] sm:$0xff] %v714
          %736 = vst [vmem:[%s319 + $0x70] sm:$0xff] %v717
          %737 = vst [vmem:[%s319 + $0x78] sm:$0xff] %v720
        $region52: #{tpu_custom_call.1} parent=35 // pred_fallthru
          _
        %s738 = sand.u32 %s158, 1
        %s739 = scalar_lea.sflag [#allocation5], %s738
        %s740 = sand.u32 %s158, 1
        %s741 = smul.addr %s740, 128
        %s742 = scalar_lea.vmem [#allocation8], %s741
        // Predicated region
        $region53: #{tpu_custom_call.1} parent=35 // pred_check
          %p743 = pneg %p168
        $region54: #{tpu_custom_call.1} parent=35 // pred_check_branch
          %745 = sbr.rel (%p743) target = $region56
        $region55: #{tpu_custom_call.1} parent=35 // pred_region
          %s746 = smul.u32 16, %s28
          %748 = vsyncadd %s739, 0
          %s749 = smul.addr %s27, 16
          %s750 = sadd.s32 %s746, %s749
          %s751 = smul.addr %s750, 8
          %s752 = scalar_lea.hbm %s4, %s751
          %s753 = sshll.u32 %s742, 4
          %s754 = int_to_ptr.vmem [resolvable:$true] %s753
          %s755 = sshll.u32 %s752, 4
          %s756 = int_to_ptr.hbm [resolvable:$true] %s755
          %761 = dma.vmem_to_hbm [thread:$0]  %s754, 2048, %s756, %s739, 128, 128, 8
        $region56: #{tpu_custom_call.1} parent=35 // pred_fallthru
          _
      $region36: #{tpu_custom_call.1} parent=5 // pred_fallthru
        _
      %p762 = scmp.le.s32.totalorder 2, %s17
      // Predicated region
      $region57: #{tpu_custom_call.1} parent=5 // pred_check
        %p763 = pneg %p762
      $region58: #{tpu_custom_call.1} parent=5 // pred_check_branch
        %765 = sbr.rel (%p763) target = $region60
      $region59: #{tpu_custom_call.1} parent=5 // pred_region
        %s766 = ssub.s32 %s17, 2
        // Predicated region
        $region61: #{tpu_custom_call.1} parent=59 // pred_check
          %p767 = pneg %p174
        $region62: #{tpu_custom_call.1} parent=59 // pred_check_branch
          %769 = sbr.rel (%p767) target = $region64
        $region63: #{tpu_custom_call.1} parent=59 // pred_region
          %s770 = sand.u32 %s159, 1
          %s771 = scalar_lea.sflag [#allocation5], %s770
          %s772 = sand.u32 %s159, 1
          %s773 = smul.addr %s772, 128
          %s774 = scalar_lea.vmem [#allocation8], %s773
          %776 = dma.done %s771, 2048
        $region64: #{tpu_custom_call.1} parent=59 // pred_fallthru
          _
      $region60: #{tpu_custom_call.1} parent=5 // pred_fallthru
        _
    $region6: #{tpu_custom_call.1} parent=1 // loop_footer
      %s21 = sadd.s32 1, %s17
    $region7: #{tpu_custom_call.1} parent=1 // loop_footer_branch
      %16 = sbr.rel target = $region3
    $region8: #{tpu_custom_call.1} parent=1 // loop_exit
      _
    %777 = vsyncpa [#allocation4], 1
    %s778 = scalar_lea.sflag [#allocation4], 1
    %779 = vsyncpa %s778, 1
    %780 = vsyncpa [#allocation7], 1
    %781 = vsyncpa [#allocation5], 1
    %s782 = scalar_lea.sflag [#allocation5], 1
    %783 = vsyncpa %s782, 1

</llo_original>
